<compile_context>
chip_gen: v6e
topology: v6e:2x2x1
jax: 0.10.0
libtpu: 0.0.40
codegen_flags: <defaults>
</compile_context>

<pallas_src>
import functools
import math

import jax
import jax.numpy as jnp
from jax.experimental import pallas as pl
from jax.experimental.pallas import tpu as pltpu

_INV_LN2 = 1.0 / math.log(2.0)


# ----------------------------------------------------------------------------
# helpers
# ----------------------------------------------------------------------------
def _round_up(x, mult):
    return ((x + mult - 1) // mult) * mult


def _row_plan(rows, cap):
    """Fixed row tile (multiple of 8, <= cap), grid size, padded row count."""
    tm = min(cap, _round_up(rows, 8))
    grid = pl.cdiv(rows, tm)
    return tm, grid, tm * grid


def _pad_rows(x, rows):
    if x.shape[0] == rows:
        return x
    pad = [(0, rows - x.shape[0])] + [(0, 0)] * (x.ndim - 1)
    return jnp.pad(x, pad)


def _params(sem):
    return pltpu.CompilerParams(dimension_semantics=(sem,))


# ----------------------------------------------------------------------------
# Pallas kernels (fused per sub-module)
# ----------------------------------------------------------------------------
def _awds_kernel(rel_ref, w1_ref, b1_ref, wa_ref, o_ref):
    """AWDS fused: per-window linear+ReLU -> attention logits -> softmax pool."""
    rel = rel_ref[...]                                    # (TM, K, 3)
    w1 = w1_ref[...]                                      # (3, C)
    # depth-3 contraction as VPU broadcast-FMAs (no MXU pass wasted)
    h = (rel[..., 0:1] * w1[0:1, :]
         + rel[..., 1:2] * w1[1:2, :]
         + rel[..., 2:3] * w1[2:3, :]
         + b1_ref[...])                                   # (TM, K, C)
    h = jnp.maximum(h, 0.0)
    # softmax over the window on a (TM, K) view (K on lanes); attention bias is
    # dropped because softmax is shift-invariant.
    logits = jnp.sum(h * wa_ref[...], axis=-1)            # (TM, K)
    logits = logits - jnp.max(logits, axis=1, keepdims=True)
    p = jnp.exp(logits)
    p = p / jnp.sum(p, axis=1, keepdims=True)
    o_ref[...] = jnp.sum(p[:, :, None] * h, axis=1)       # (TM, C)


def _dwem_kernel(w_ref, w1_ref, b1_ref, w2_ref, b2_ref, o_ref):
    """DWEM fused: linear+ReLU -> window max-pool -> output linear."""
    w = w_ref[...]                                        # (TM, k, 3)
    w1 = w1_ref[...]                                      # (3, C)
    h = (w[..., 0:1] * w1[0:1, :]
         + w[..., 1:2] * w1[1:2, :]
         + w[..., 2:3] * w1[2:3, :]
         + b1_ref[...])                                   # (TM, k, C)
    h = jnp.maximum(h, 0.0)
    pooled = jnp.max(h, axis=1)                           # (TM, C)
    o_ref[...] = (jnp.dot(pooled, w2_ref[...],
                          preferred_element_type=jnp.float32) + b2_ref[...])


def _bottleneck_kernel(skin_ref, mu_ref, ls_ref, noise_ref,
                       sqw_ref, sqb_ref, stw_ref, stb_ref,
                       rec_ref, bits_ref, *, valid_rows, padded):
    """Fused fea_squeeze -> +uniform noise -> bitrate -> fea_stretch.

    y / per-element bits stay in VMEM; only rec_skin and one scalar bit-sum per
    grid step (SMEM) are written out.
    """
    tm = skin_ref.shape[0]
    y = (jnp.dot(skin_ref[...], sqw_ref[...], preferred_element_type=jnp.float32)
         + sqb_ref[...] + noise_ref[...])                 # quantized_compact_fea
    mu = mu_ref[...]
    # 1/clip(exp(ls),1e-10,1e10) == clip(exp(-ls),1e-10,1e10): one exp, no divides
    inv_sigma = jnp.clip(jnp.exp(-ls_ref[...]), 1e-10, 1e10)
    z_hi = (y + 0.5 - mu) * inv_sigma
    z_lo = (y - 0.5 - mu) * inv_sigma
    if padded:                                            # padded rows -> probs=1 -> 0 bits
        row = pl.program_id(0) * tm + jax.lax.broadcasted_iota(jnp.int32, (tm, 1), 0)
        valid = row < valid_rows
        z_hi = jnp.where(valid, z_hi, 40.0)
        z_lo = jnp.where(valid, z_lo, -40.0)
    nb = z_hi.shape[-1]
    if nb < 128 and (tm * nb) % 128 == 0:
        # pack the transcendental chain to full 128-lane width (EUP is the
        # binding unit here; the sublane->lane relayout uses idle XLU slots)
        z_hi = z_hi.reshape(-1, 128)
        z_lo = z_lo.reshape(-1, 128)

    def ncdf(z):
        # TODO(synk): tanh-based approximation of the Gaussian CDF (exact erf not used in-kernel).
        return 0.5 * (1.0 + jnp.tanh(0.7978845608028654 * (z + 0.044715 * z * z * z)))

    probs = jnp.maximum(ncdf(z_hi) - ncdf(z_lo), 0.0)     # clamp: cancellation safety
    bits = jnp.clip(-jnp.log(probs + 1e-10) * _INV_LN2, 0.0, 50.0)
    bits_ref[pl.program_id(0)] = jnp.sum(bits)            # one scalar per tile (SMEM)

    rec_ref[...] = (jnp.dot(y, stw_ref[...],
                            preferred_element_type=jnp.float32) + stb_ref[...])


def _dwus_kernel(f_ref, sb_ref, w1f_ref, w2t_ref, b2_ref, c_ref, s_ref, o_ref):
    """DWUS fused folding MLP without the K-fold input repeat.

    h[b, f] = relu(f_eff[b] @ W1[:C] + (seeds[f] @ W1[C:] + b1))   (split matmul)
    pts[b, f] = center[b] + scale[b] * tanh(h[b, f] @ W2 + b2)
    Output is a lane-dense (TM, 3K) slab with xyz interleaved per point, so the
    wrapper reshape to (m*K, 3) is a pure view (no HBM relayout).
    """
    fp = jnp.dot(f_ref[...], w1f_ref[...],
                 preferred_element_type=jnp.float32)      # (TM, H) -- once per bone
    h = jnp.maximum(fp[:, None, :] + sb_ref[...][None, :, :], 0.0)   # (TM, K, H)
    w2t = w2t_ref[...]                                    # (3, H)
    b2 = b2_ref[...]                                      # (1, 3)
    c = c_ref[...]                                        # (TM, 3)
    s = s_ref[...]                                        # (TM, 1)
    coords = []
    for j in range(3):                                    # 32->3 projection: lane reductions
        off = jnp.tanh(jnp.sum(h * w2t[j:j + 1, :], axis=-1)
                       + b2[0:1, j:j + 1])                # (TM, K)
        coords.append(c[:, j:j + 1] + s * off)
    pts = jnp.stack(coords, axis=-1)                      # (TM, K, 3)
    o_ref[...] = pts.reshape(pts.shape[0], -1)            # (TM, 3K) lane-dense store


# ----------------------------------------------------------------------------
# Sub-modules (JAX glue + fused Pallas calls)
# ----------------------------------------------------------------------------
def _knn_idx(query, points, kk):
    # TODO(synk): dense (Q x N) distance matrix + top_k in XLA; block it for large N.
    d2 = (jnp.sum(query * query, -1, keepdims=True)
          - 2.0 * query @ points.T
          + jnp.sum(points * points, -1)[None, :])
    _, idx = jax.lax.top_k(-d2, kk)
    return idx                                            # (Q, kk)


def awds_forward(p, batch_x, K):
    """Attention-based Window Down-Sampling -> (skin_fea, bones)."""
    x = batch_x[0]
    n = x.shape[0]
    m = n // K
    bones = x[:: (n // m)][:m]    # TODO(synk): strided stand-in for farthest point sampling
    idx = _knn_idx(bones, x, K)                           # (m, K) index glue
    # TODO(synk): gather stays in XLA; could move in-kernel via scalar prefetch.
    rel = x[idx] - bones[:, None, :]                      # (m, K, 3)
    C = p["awds_w1"].shape[1]
    tm, grid, m_pad = _row_plan(m, cap=128)
    rel_p = _pad_rows(rel, m_pad)
    cost = pl.CostEstimate(flops=int(10 * m * K * C), transcendentals=int(m * K),
                           bytes_accessed=int(4 * (m * K * 3 + m * C + 5 * C)))
    skin = pl.pallas_call(
        _awds_kernel,
        out_shape=jax.ShapeDtypeStruct((m_pad, C), jnp.float32),
        grid=(grid,),
        in_specs=[
            pl.BlockSpec((tm, K, 3), lambda i: (i, 0, 0)),
            pl.BlockSpec((3, C), lambda i: (0, 0)),
            pl.BlockSpec((1, C), lambda i: (0, 0)),
            pl.BlockSpec((1, C), lambda i: (0, 0)),
        ],
        out_specs=pl.BlockSpec((tm, C), lambda i: (i, 0)),
        compiler_params=_params("parallel"),
        cost_estimate=cost,
    )(rel_p, p["awds_w1"], p["awds_b1"].reshape(1, C), p["awds_wa"].T)
    return skin[:m][None], bones[None]                    # (1, m, C), (1, m, 3)


def dw_build(bones, k):
    """Dilated-window build: k nearest bones (relative coords) -- index glue."""
    b = bones[0]
    idx = _knn_idx(b, b, k)                               # (m, k)
    windows = b[idx] - b[:, None, :]                      # (m, k, 3)
    return idx[None], windows[None]


def dwem_forward(p, dilated_windows, bottleneck):
    """Dilated-Window Entropy Model -> (mu, log_sigma)."""
    w = dilated_windows[0]
    m, k, _ = w.shape
    C = p["dwem_w1"].shape[1]
    B2 = p["dwem_w2"].shape[1]
    tm, grid, m_pad = _row_plan(m, cap=256)
    w_p = _pad_rows(w, m_pad)
    cost = pl.CostEstimate(flops=int(6 * m * k * C + 2 * m * C * B2), transcendentals=0,
                           bytes_accessed=int(4 * (m * k * 3 + m * B2 + C * B2 + 4 * C + B2)))
    ms = pl.pallas_call(
        _dwem_kernel,
        out_shape=jax.ShapeDtypeStruct((m_pad, B2), jnp.float32),
        grid=(grid,),
        in_specs=[
            pl.BlockSpec((tm, k, 3), lambda i: (i, 0, 0)),
            pl.BlockSpec((3, C), lambda i: (0, 0)),
            pl.BlockSpec((1, C), lambda i: (0, 0)),
            pl.BlockSpec((C, B2), lambda i: (0, 0)),
            pl.BlockSpec((1, B2), lambda i: (0, 0)),
        ],
        out_specs=pl.BlockSpec((tm, B2), lambda i: (i, 0)),
        compiler_params=_params("parallel"),
        cost_estimate=cost,
    )(w_p, p["dwem_w1"], p["dwem_b1"].reshape(1, C),
      p["dwem_w2"], p["dwem_b2"].reshape(1, B2))
    ms = ms[:m]
    return ms[:, :bottleneck][None], ms[:, bottleneck:][None]


def bottleneck_forward(p, skin, mu, ls, noise_key):
    """Fused fea_squeeze + quantization noise + bitrate + fea_stretch."""
    m, C = skin.shape
    B = p["sq_w"].shape[1]
    tm, grid, m_pad = _row_plan(m, cap=1024)
    noise = jax.random.uniform(noise_key, (m_pad, B), jnp.float32, -0.5, 0.5)
    skin_p = _pad_rows(skin, m_pad)
    mu_p = _pad_rows(mu, m_pad)
    ls_p = _pad_rows(ls, m_pad)
    kernel = functools.partial(_bottleneck_kernel, valid_rows=m, padded=(m_pad != m))
    cost = pl.CostEstimate(flops=int(4 * m * C * B + 16 * m * B),
                           transcendentals=int(4 * m * B),
                           bytes_accessed=int(4 * (2 * m * C + 3 * m * B + 2 * C * B + C + B)))
    rec, tile_bits = pl.pallas_call(
        kernel,
        out_shape=(jax.ShapeDtypeStruct((m_pad, C), jnp.float32),
                   jax.ShapeDtypeStruct((grid,), jnp.float32)),
        grid=(grid,),
        in_specs=[
            pl.BlockSpec((tm, C), lambda i: (i, 0)),              # skin features
            pl.BlockSpec((tm, B), lambda i: (i, 0)),              # mu
            pl.BlockSpec((tm, B), lambda i: (i, 0)),              # log_sigma
            pl.BlockSpec((tm, B), lambda i: (i, 0)),              # uniform noise
            pl.BlockSpec((C, B), lambda i: (0, 0)),               # sq_w
            pl.BlockSpec((1, B), lambda i: (0, 0)),               # sq_b
            pl.BlockSpec((B, C), lambda i: (0, 0)),               # st_w
            pl.BlockSpec((1, C), lambda i: (0, 0)),               # st_b
        ],
        out_specs=(pl.BlockSpec((tm, C), lambda i: (i, 0)),
                   pl.BlockSpec(memory_space=pltpu.MemorySpace.SMEM)),
        compiler_params=_params("arbitrary"),
        cost_estimate=cost,
    )(skin_p, mu_p, ls_p, noise,
      p["sq_w"], p["sq_b"].reshape(1, B), p["st_w"], p["st_b"].reshape(1, C))
    return rec[:m], tile_bits


def dwus_forward(p, rec_skin, bones, dilated_windows, dilated_idx, K):
    """Dilated-Window Up-Sampling: K folded points per bone."""
    f = rec_skin[0]                                       # (m, C)
    b = bones[0]                                          # (m, 3)
    w = dilated_windows[0]                                # (m, k, 3)
    idx = dilated_idx[0]                                  # (m, k)
    m, C = f.shape
    # TODO(synk): adaptive per-window upsampling count (R_max / r) replaced by a fixed K-fold grid.
    # TODO(synk): neighbour-context gather stays in XLA (in-kernel gather via scalar prefetch not done).
    ctx = jnp.mean(f[idx], axis=1)
    f_eff = 0.5 * (f + ctx)
    scale = jnp.max(jnp.sqrt(jnp.sum(w * w, axis=-1)), axis=-1, keepdims=True)   # (m, 1)
    seeds = p["fold_seeds"]                               # (K, F)
    H = p["dwus_w1"].shape[1]
    # split x_in @ W1: seed branch is tiny and computed exactly once (no K-fold repeat)
    seed_bias = seeds @ p["dwus_w1"][C:] + p["dwus_b1"][None, :]                 # (K, H)
    tm, grid, m_pad = _row_plan(m, cap=128)
    f_eff_p = _pad_rows(f_eff, m_pad)
    centers_p = _pad_rows(b, m_pad)
    scale_p = _pad_rows(scale, m_pad)
    cost = pl.CostEstimate(flops=int(2 * m * C * H + 8 * m * K * H + 6 * m * K),
                           transcendentals=int(3 * m * K),
                           bytes_accessed=int(4 * (m * C + m * 3 * K + C * H + K * H + 4 * m)))
    folded = pl.pallas_call(
        _dwus_kernel,
        out_shape=jax.ShapeDtypeStruct((m_pad, 3 * K), jnp.float32),
        grid=(grid,),
        in_specs=[
            pl.BlockSpec((tm, C), lambda i: (i, 0)),              # f_eff
            pl.BlockSpec((K, H), lambda i: (0, 0)),               # seed_bias
            pl.BlockSpec((C, H), lambda i: (0, 0)),               # W1[:C]
            pl.BlockSpec((3, H), lambda i: (0, 0)),               # W2^T
            pl.BlockSpec((1, 3), lambda i: (0, 0)),               # b2
            pl.BlockSpec((tm, 3), lambda i: (i, 0)),              # centers (unexpanded)
            pl.BlockSpec((tm, 1), lambda i: (i, 0)),              # scales  (unexpanded)
        ],
        out_specs=pl.BlockSpec((tm, 3 * K), lambda i: (i, 0)),
        compiler_params=_params("parallel"),
        cost_estimate=cost,
    )(f_eff_p, seed_bias, p["dwus_w1"][:C], p["dwus_w2"].T,
      p["dwus_b2"].reshape(1, 3), centers_p, scale_p)
    pts = folded[:m].reshape(m * K, 3)                    # pure view reshape (no transpose)
    return pts[None]                                      # (1, m*K, 3)


# ----------------------------------------------------------------------------
# Pointsoup forward
# ----------------------------------------------------------------------------
def pointsoup_forward(params, batch_x, K, noise_key):
    n = batch_x.shape[1]
    skin_fea, bones = awds_forward(params, batch_x, K)
    dilated_idx, dilated_windows = dw_build(bones, params["dw_k"])
    mu, log_sigma = dwem_forward(params, dilated_windows, params["bottleneck"])
    rec_skin, tile_bits = bottleneck_forward(params, skin_fea[0], mu[0], log_sigma[0], noise_key)
    bitrate = jnp.sum(tile_bits) / n
    rec_batch_x = dwus_forward(params, rec_skin[None], bones, dilated_windows, dilated_idx, K)
    return rec_batch_x, bitrate


def init_params(key, k, channel, bottleneck, K, fold_channel=8):
    keys = jax.random.split(key, 9)

    def w(kk, shape):
        return (jax.random.normal(kk, shape, jnp.float32) / jnp.sqrt(shape[0])).astype(jnp.float32)

    z = lambda shape: jnp.zeros(shape, jnp.float32)
    return {
        "awds_w1": w(keys[0], (3, channel)), "awds_b1": z((channel,)),
        "awds_wa": w(keys[1], (channel, 1)), "awds_ba": z((1,)),   # ba is a softmax no-op
        "sq_w": w(keys[2], (channel, bottleneck)), "sq_b": z((bottleneck,)),
        "dwem_w1": w(keys[3], (3, channel)), "dwem_b1": z((channel,)),
        "dwem_w2": w(keys[4], (channel, 2 * bottleneck)), "dwem_b2": z((2 * bottleneck,)),
        "st_w": w(keys[5], (bottleneck, channel)), "st_b": z((channel,)),
        "fold_seeds": w(keys[6], (K, fold_channel)),
        "dwus_w1": w(keys[7], (channel + fold_channel, channel)), "dwus_b1": z((channel,)),
        "dwus_w2": w(keys[8], (channel, 3)), "dwus_b2": z((3,)),
        "dw_k": k,
        "bottleneck": bottleneck,
    }


if __name__ == "__main__":
    k = 4               # dilated window size (DWBuild)
    channel = 32
    bottleneck = 16
    K = 8               # local window size
    N = 64              # number of input points

    key = jax.random.PRNGKey(0)
    pkey, xkey, nkey = jax.random.split(key, 3)
    params = init_params(pkey, k, channel, bottleneck, K)
    batch_x = jax.random.uniform(xkey, (1, N, 3), dtype=jnp.float32)

    rec_batch_x, bitrate = pointsoup_forward(params, batch_x, K, nkey)
    jax.block_until_ready((rec_batch_x, bitrate))

    assert rec_batch_x.shape == (1, (N // K) * K, 3)
    assert bitrate.shape == ()
    assert bool(jnp.all(jnp.isfinite(rec_batch_x))) and bool(jnp.isfinite(bitrate))
    print("KERNEL_OK")
</pallas_src>

<mosaic_0001>
module attributes {stable_mosaic.version = 11 : i64} {
  func.func @_awds_kernel(%arg0: i32, %arg1: memref<8x8x3xf32, #tpu.memory_space<vmem>>, %arg2: memref<3x32xf32, #tpu.memory_space<vmem>>, %arg3: memref<1x32xf32, #tpu.memory_space<vmem>>, %arg4: memref<1x32xf32, #tpu.memory_space<vmem>>, %arg5: memref<8x32xf32, #tpu.memory_space<vmem>>) attributes {dimension_semantics = [#tpu.dimension_semantics<parallel>], iteration_bounds = array<i64: 1>, scalar_prefetch = 0 : i64, scratch_operands = 0 : i64, tpu.core_type = #tpu.core_type<tc>, window_params = [{transform_indices = @transform_0, window_bounds = array<i64: 8, 8, 3>}, {pipeline_mode = #tpu.pipeline_mode<synchronous>, transform_indices = @transform_1, window_bounds = array<i64: 3, 32>}, {pipeline_mode = #tpu.pipeline_mode<synchronous>, transform_indices = @transform_2, window_bounds = array<i64: 1, 32>}, {pipeline_mode = #tpu.pipeline_mode<synchronous>, transform_indices = @transform_3, window_bounds = array<i64: 1, 32>}, {transform_indices = @transform_4, window_bounds = array<i64: 8, 32>}]} {
    %c0 = arith.constant 0 : index
    %c0_0 = arith.constant 0 : index
    %c0_1 = arith.constant 0 : index
    %0 = vector.load %arg1[%c0, %c0_0, %c0_1] : memref<8x8x3xf32, #tpu.memory_space<vmem>>, vector<8x8x3xf32>
    %c0_2 = arith.constant 0 : index
    %c0_3 = arith.constant 0 : index
    %1 = vector.load %arg2[%c0_2, %c0_3] : memref<3x32xf32, #tpu.memory_space<vmem>>, vector<3x32xf32>
    %2 = vector.extract_strided_slice %0 {offsets = [0, 0, 0], sizes = [8, 8, 1], strides = [1, 1, 1]} : vector<8x8x3xf32> to vector<8x8x1xf32>
    %3 = vector.extract_strided_slice %1 {offsets = [0, 0], sizes = [1, 32], strides = [1, 1]} : vector<3x32xf32> to vector<1x32xf32>
    %4 = vector.shape_cast %3 : vector<1x32xf32> to vector<1x1x32xf32>
    %5 = vector.broadcast %2 : vector<8x8x1xf32> to vector<8x8x32xf32>
    %6 = vector.broadcast %4 : vector<1x1x32xf32> to vector<8x8x32xf32>
    %7 = arith.mulf %5, %6 : vector<8x8x32xf32>
    %8 = vector.extract_strided_slice %0 {offsets = [0, 0, 1], sizes = [8, 8, 1], strides = [1, 1, 1]} : vector<8x8x3xf32> to vector<8x8x1xf32>
    %9 = vector.extract_strided_slice %1 {offsets = [1, 0], sizes = [1, 32], strides = [1, 1]} : vector<3x32xf32> to vector<1x32xf32>
    %10 = vector.shape_cast %9 : vector<1x32xf32> to vector<1x1x32xf32>
    %11 = vector.broadcast %8 : vector<8x8x1xf32> to vector<8x8x32xf32>
    %12 = vector.broadcast %10 : vector<1x1x32xf32> to vector<8x8x32xf32>
    %13 = arith.mulf %11, %12 : vector<8x8x32xf32>
    %14 = arith.addf %7, %13 : vector<8x8x32xf32>
    %15 = vector.extract_strided_slice %0 {offsets = [0, 0, 2], sizes = [8, 8, 1], strides = [1, 1, 1]} : vector<8x8x3xf32> to vector<8x8x1xf32>
    %16 = vector.extract_strided_slice %1 {offsets = [2, 0], sizes = [1, 32], strides = [1, 1]} : vector<3x32xf32> to vector<1x32xf32>
    %17 = vector.shape_cast %16 : vector<1x32xf32> to vector<1x1x32xf32>
    %18 = vector.broadcast %15 : vector<8x8x1xf32> to vector<8x8x32xf32>
    %19 = vector.broadcast %17 : vector<1x1x32xf32> to vector<8x8x32xf32>
    %20 = arith.mulf %18, %19 : vector<8x8x32xf32>
    %21 = arith.addf %14, %20 : vector<8x8x32xf32>
    %c0_4 = arith.constant 0 : index
    %c0_5 = arith.constant 0 : index
    %22 = vector.load %arg3[%c0_4, %c0_5] : memref<1x32xf32, #tpu.memory_space<vmem>>, vector<1x32xf32>
    %23 = vector.shape_cast %22 : vector<1x32xf32> to vector<1x1x32xf32>
    %24 = vector.broadcast %23 : vector<1x1x32xf32> to vector<8x8x32xf32>
    %25 = arith.addf %21, %24 : vector<8x8x32xf32>
    %cst = arith.constant 0.000000e+00 : f32
    %26 = vector.broadcast %cst : f32 to vector<8x8x32xf32>
    %27 = arith.maximumf %25, %26 : vector<8x8x32xf32>
    %c0_6 = arith.constant 0 : index
    %c0_7 = arith.constant 0 : index
    %28 = vector.load %arg4[%c0_6, %c0_7] : memref<1x32xf32, #tpu.memory_space<vmem>>, vector<1x32xf32>
    %29 = vector.shape_cast %28 : vector<1x32xf32> to vector<1x1x32xf32>
    %30 = vector.broadcast %29 : vector<1x1x32xf32> to vector<8x8x32xf32>
    %31 = arith.mulf %27, %30 : vector<8x8x32xf32>
    %cst_8 = arith.constant dense<0.000000e+00> : vector<8x8xf32>
    %32 = vector.multi_reduction <add>, %31, %cst_8 [2] : vector<8x8x32xf32> to vector<8x8xf32>
    %cst_9 = arith.constant dense<0xFF800000> : vector<8xf32>
    %33 = vector.multi_reduction <maximumf>, %32, %cst_9 [1] : vector<8x8xf32> to vector<8xf32>
    %34 = vector.shape_cast %33 : vector<8xf32> to vector<8x1xf32>
    %35 = vector.broadcast %34 : vector<8x1xf32> to vector<8x8xf32>
    %36 = arith.subf %32, %35 : vector<8x8xf32>
    %37 = math.exp %36 : vector<8x8xf32>
    %cst_10 = arith.constant dense<0.000000e+00> : vector<8xf32>
    %38 = vector.multi_reduction <add>, %37, %cst_10 [1] : vector<8x8xf32> to vector<8xf32>
    %39 = vector.shape_cast %38 : vector<8xf32> to vector<8x1xf32>
    %40 = vector.broadcast %39 : vector<8x1xf32> to vector<8x8xf32>
    %41 = arith.divf %37, %40 : vector<8x8xf32>
    %42 = vector.shape_cast %41 : vector<8x8xf32> to vector<8x8x1xf32>
    %43 = vector.broadcast %42 : vector<8x8x1xf32> to vector<8x8x32xf32>
    %44 = arith.mulf %43, %27 : vector<8x8x32xf32>
    %cst_11 = arith.constant dense<0.000000e+00> : vector<8x32xf32>
    %45 = vector.multi_reduction <add>, %44, %cst_11 [1] : vector<8x8x32xf32> to vector<8x32xf32>
    %c0_12 = arith.constant 0 : index
    %c0_13 = arith.constant 0 : index
    %46 = vector.load %arg5[%c0_12, %c0_13] : memref<8x32xf32, #tpu.memory_space<vmem>>, vector<8x32xf32>
    tpu.vector_store %arg5[%c0_12, %c0_13], %45 {strides = array<i32>} : memref<8x32xf32, #tpu.memory_space<vmem>>, vector<8x32xf32>,
    return
  }
  func.func @transform_0(%arg0: i32) -> (i32, i32, i32) {
    %c0_i32 = arith.constant 0 : i32
    %c0_i32_0 = arith.constant 0 : i32
    %c0_i32_1 = arith.constant 0 : i32
    return %arg0, %c0_i32, %c0_i32_0 : i32, i32, i32
  }
  func.func @transform_1(%arg0: i32) -> (i32, i32) {
    %c0_i32 = arith.constant 0 : i32
    %c0_i32_0 = arith.constant 0 : i32
    %c0_i32_1 = arith.constant 0 : i32
    return %c0_i32, %c0_i32_0 : i32, i32
  }
  func.func @transform_2(%arg0: i32) -> (i32, i32) {
    %c0_i32 = arith.constant 0 : i32
    %c0_i32_0 = arith.constant 0 : i32
    %c0_i32_1 = arith.constant 0 : i32
    return %c0_i32, %c0_i32_0 : i32, i32
  }
  func.func @transform_3(%arg0: i32) -> (i32, i32) {
    %c0_i32 = arith.constant 0 : i32
    %c0_i32_0 = arith.constant 0 : i32
    %c0_i32_1 = arith.constant 0 : i32
    return %c0_i32, %c0_i32_0 : i32, i32
  }
  func.func @transform_4(%arg0: i32) -> (i32, i32) {
    %c0_i32 = arith.constant 0 : i32
    %c0_i32_0 = arith.constant 0 : i32
    return %arg0, %c0_i32 : i32, i32
  }
}

</mosaic_0001>

<llo_original>
// kernel: tpu_custom_call.1
$region0: #{tpu_custom_call.1}
  #allocation0 [shape = 'u32[]', space=smem, size = 0x4, offset = 0x4, fixed_abs, tag = 'smem constant byte address 0x4 - core index']
  #allocation1 [shape = 'u32[144,128]{1,0:T(1,128)}', space=vmem, size = 0x12000, scoped, tag = 'internal scratch']
  %s0 = inlined_call_operand.vmem [shape: f32[8,8,3], index: 0, kind: input, shape index: {}]
  %s1 = inlined_call_operand.vmem [shape: f32[3,32], index: 1, kind: input, shape index: {}]
  %s2 = inlined_call_operand.vmem [shape: f32[1,32], index: 2, kind: input, shape index: {}]
  %s3 = inlined_call_operand.vmem [shape: f32[1,32], index: 3, kind: input, shape index: {}]
  %s4 = inlined_call_operand.hbm [shape: f32[8,32], index: 4, kind: output, shape index: {}]
  %s5 = sld [smem:[#allocation0]]
  $region26: #{tpu_custom_call.1} parent=0
    _
  %s7 = ssub.s32 1, %s5
  %s8 = scalar_select 0, %s7, %s5
  $region1: #{tpu_custom_call.1} parent=0
    #allocation2 [shape = 'u8[4096]{0}', space=vmem, size = 0x1000, scoped, tag = 'output window, operand 0, single buffered']
    #allocation3 [shape = 's32[1]{0}', space=sflag, size = 0x4, scoped, tag = 'scoped memory for tpu_custom_call.1']
    %9 = vsyncpa [#allocation3], 0
    // Predicated region
    $region2: #{tpu_custom_call.1} parent=1 // pred_check
      _
    $region3: #{tpu_custom_call.1} parent=1 // pred_check_branch
      %11 = sbr.rel (0) target = $region5
    $region4: #{tpu_custom_call.1} parent=1 // pred_region
      _
    $region5: #{tpu_custom_call.1} parent=1 // pred_fallthru
      _
    // Predicated region
    $region6: #{tpu_custom_call.1} parent=1 // pred_check
      _
    $region7: #{tpu_custom_call.1} parent=1 // pred_check_branch
      %13 = sbr.rel (0) target = $region9
    $region8: #{tpu_custom_call.1} parent=1 // pred_region
      _
    $region9: #{tpu_custom_call.1} parent=1 // pred_fallthru
      _
    // Predicated region
    $region10: #{tpu_custom_call.1} parent=1 // pred_check
      _
    $region11: #{tpu_custom_call.1} parent=1 // pred_check_branch
      %15 = sbr.rel (0) target = $region13
    $region12: #{tpu_custom_call.1} parent=1 // pred_region
      _
    $region13: #{tpu_custom_call.1} parent=1 // pred_fallthru
      _
    // Predicated region
    $region14: #{tpu_custom_call.1} parent=1 // pred_check
      _
    $region15: #{tpu_custom_call.1} parent=1 // pred_check_branch
      %17 = sbr.rel (0) target = $region17
    $region16: #{tpu_custom_call.1} parent=1 // pred_region
      _
    $region17: #{tpu_custom_call.1} parent=1 // pred_fallthru
      _
    %v18 = vld [vmem:[%s0] sm:$0xff]
    %v19 = vld [vmem:[%s0 + $0x8] sm:$0xff]
    %v20 = vld [vmem:[%s0 + $0x10] sm:$0xff]
    %v21 = vld [vmem:[%s0 + $0x18] sm:$0xff]
    %v22 = vld [vmem:[%s0 + $0x20] sm:$0xff]
    %v23 = vld [vmem:[%s0 + $0x28] sm:$0xff]
    %v24 = vld [vmem:[%s0 + $0x30] sm:$0xff]
    %v25 = vld [vmem:[%s0 + $0x38] sm:$0xff]
    %v26 = vld [vmem:[%s1] sm:$0x7]
    %28 = vset.pattern.permute.xlu0 0
    %29 = vperm.xlu0 %28, %v18
    %v30 = vpop.permute.xlu0 %29
    %33 = vset.pattern.permute.xlu0 0
    %34 = vperm.xlu0 %33, %v19
    %v35 = vpop.permute.xlu0 %34
    %38 = vset.pattern.permute.xlu0 0
    %39 = vperm.xlu0 %38, %v20
    %v40 = vpop.permute.xlu0 %39
    %43 = vset.pattern.permute.xlu0 0
    %44 = vperm.xlu0 %43, %v21
    %v45 = vpop.permute.xlu0 %44
    %48 = vset.pattern.permute.xlu0 0
    %49 = vperm.xlu0 %48, %v22
    %v50 = vpop.permute.xlu0 %49
    %53 = vset.pattern.permute.xlu0 0
    %54 = vperm.xlu0 %53, %v23
    %v55 = vpop.permute.xlu0 %54
    %58 = vset.pattern.permute.xlu0 0
    %59 = vperm.xlu0 %58, %v24
    %v60 = vpop.permute.xlu0 %59
    %63 = vset.pattern.permute.xlu0 0
    %64 = vperm.xlu0 %63, %v25
    %v65 = vpop.permute.xlu0 %64
    %v67 = vlaneseq
    %v68 = vshrl.u32 %v67, 7
    %v69 = vsub.s32 0, %v68
    %v70 = vrot.slane %v26, %v69
    %v71 = vmul.f32 %v30, %v70
    %v72 = vmul.f32 %v35, %v70
    %v73 = vmul.f32 %v40, %v70
    %v74 = vmul.f32 %v45, %v70
    %v75 = vmul.f32 %v50, %v70
    %v76 = vmul.f32 %v55, %v70
    %v77 = vmul.f32 %v60, %v70
    %v78 = vmul.f32 %v65, %v70
    %79 = vset.pattern.permute.xlu0 1
    %80 = vperm.xlu0 %79, %v18
    %v81 = vpop.permute.xlu0 %80
    %83 = vset.pattern.permute.xlu0 1
    %84 = vperm.xlu0 %83, %v19
    %v85 = vpop.permute.xlu0 %84
    %87 = vset.pattern.permute.xlu0 1
    %88 = vperm.xlu0 %87, %v20
    %v89 = vpop.permute.xlu0 %88
    %91 = vset.pattern.permute.xlu0 1
    %92 = vperm.xlu0 %91, %v21
    %v93 = vpop.permute.xlu0 %92
    %95 = vset.pattern.permute.xlu0 1
    %96 = vperm.xlu0 %95, %v22
    %v97 = vpop.permute.xlu0 %96
    %99 = vset.pattern.permute.xlu0 1
    %100 = vperm.xlu0 %99, %v23
    %v101 = vpop.permute.xlu0 %100
    %103 = vset.pattern.permute.xlu0 1
    %104 = vperm.xlu0 %103, %v24
    %v105 = vpop.permute.xlu0 %104
    %107 = vset.pattern.permute.xlu0 1
    %108 = vperm.xlu0 %107, %v25
    %v109 = vpop.permute.xlu0 %108
    %v111 = vlaneseq
    %v112 = vshrl.u32 %v111, 7
    %v113 = vsub.s32 1, %v112
    %v114 = vrot.slane %v26, %v113
    %v115 = vmul.f32 %v81, %v114
    %v116 = vmul.f32 %v85, %v114
    %v117 = vmul.f32 %v89, %v114
    %v118 = vmul.f32 %v93, %v114
    %v119 = vmul.f32 %v97, %v114
    %v120 = vmul.f32 %v101, %v114
    %v121 = vmul.f32 %v105, %v114
    %v122 = vmul.f32 %v109, %v114
    %v123 = vadd.f32 %v71, %v115
    %v124 = vadd.f32 %v72, %v116
    %v125 = vadd.f32 %v73, %v117
    %v126 = vadd.f32 %v74, %v118
    %v127 = vadd.f32 %v75, %v119
    %v128 = vadd.f32 %v76, %v120
    %v129 = vadd.f32 %v77, %v121
    %v130 = vadd.f32 %v78, %v122
    %131 = vset.pattern.permute.xlu0 2
    %132 = vperm.xlu0 %131, %v18
    %v133 = vpop.permute.xlu0 %132
    %135 = vset.pattern.permute.xlu0 2
    %136 = vperm.xlu0 %135, %v19
    %v137 = vpop.permute.xlu0 %136
    %139 = vset.pattern.permute.xlu0 2
    %140 = vperm.xlu0 %139, %v20
    %v141 = vpop.permute.xlu0 %140
    %143 = vset.pattern.permute.xlu0 2
    %144 = vperm.xlu0 %143, %v21
    %v145 = vpop.permute.xlu0 %144
    %147 = vset.pattern.permute.xlu0 2
    %148 = vperm.xlu0 %147, %v22
    %v149 = vpop.permute.xlu0 %148
    %151 = vset.pattern.permute.xlu0 2
    %152 = vperm.xlu0 %151, %v23
    %v153 = vpop.permute.xlu0 %152
    %155 = vset.pattern.permute.xlu0 2
    %156 = vperm.xlu0 %155, %v24
    %v157 = vpop.permute.xlu0 %156
    %159 = vset.pattern.permute.xlu0 2
    %160 = vperm.xlu0 %159, %v25
    %v161 = vpop.permute.xlu0 %160
    %v163 = vlaneseq
    %v164 = vshrl.u32 %v163, 7
    %v165 = vsub.s32 2, %v164
    %v166 = vrot.slane %v26, %v165
    %v167 = vmul.f32 %v133, %v166
    %v168 = vmul.f32 %v137, %v166
    %v169 = vmul.f32 %v141, %v166
    %v170 = vmul.f32 %v145, %v166
    %v171 = vmul.f32 %v149, %v166
    %v172 = vmul.f32 %v153, %v166
    %v173 = vmul.f32 %v157, %v166
    %v174 = vmul.f32 %v161, %v166
    %v175 = vadd.f32 %v123, %v167
    %v176 = vadd.f32 %v124, %v168
    %v177 = vadd.f32 %v125, %v169
    %v178 = vadd.f32 %v126, %v170
    %v179 = vadd.f32 %v127, %v171
    %v180 = vadd.f32 %v128, %v172
    %v181 = vadd.f32 %v129, %v173
    %v182 = vadd.f32 %v130, %v174
    %v183 = vld [vmem:[%s2] sm:$0x1]
    %v185 = vlaneseq
    %v186 = vshrl.u32 %v185, 7
    %v187 = vsub.s32 0, %v186
    %v188 = vrot.slane %v183, %v187
    %v190 = vadd.f32 %v175, %v188
    %v191 = vadd.f32 %v176, %v188
    %v192 = vadd.f32 %v177, %v188
    %v193 = vadd.f32 %v178, %v188
    %v194 = vadd.f32 %v179, %v188
    %v195 = vadd.f32 %v180, %v188
    %v196 = vadd.f32 %v181, %v188
    %v197 = vadd.f32 %v182, %v188
    %v198 = vmax.f32 %v190, 0.0
    %v199 = vmax.f32 %v191, 0.0
    %v200 = vmax.f32 %v192, 0.0
    %v201 = vmax.f32 %v193, 0.0
    %v202 = vmax.f32 %v194, 0.0
    %v203 = vmax.f32 %v195, 0.0
    %v204 = vmax.f32 %v196, 0.0
    %v205 = vmax.f32 %v197, 0.0
    %v206 = vld [vmem:[%s3] sm:$0x1]
    %v208 = vlaneseq
    %v209 = vshrl.u32 %v208, 7
    %v210 = vsub.s32 0, %v209
    %v211 = vrot.slane %v206, %v210
    %v213 = vmul.f32 %v198, %v211
    %v214 = vmul.f32 %v199, %v211
    %v215 = vmul.f32 %v200, %v211
    %v216 = vmul.f32 %v201, %v211
    %v217 = vmul.f32 %v202, %v211
    %v218 = vmul.f32 %v203, %v211
    %v219 = vmul.f32 %v204, %v211
    %v220 = vmul.f32 %v205, %v211
    %vm221 = vcmask 261120
    %v222 = vsel %vm221, %v213, 0.0
    %223 = vadd.xlane.f32.xlu0 %v222
    %v224 = vpop.xlane.xlu0 %223
    %v225 = vsel %vm221, %v214, 0.0
    %226 = vadd.xlane.f32.xlu0 %v225
    %v227 = vpop.xlane.xlu0 %226
    %v228 = vsel %vm221, %v215, 0.0
    %229 = vadd.xlane.f32.xlu0 %v228
    %v230 = vpop.xlane.xlu0 %229
    %v231 = vsel %vm221, %v216, 0.0
    %232 = vadd.xlane.f32.xlu0 %v231
    %v233 = vpop.xlane.xlu0 %232
    %v234 = vsel %vm221, %v217, 0.0
    %235 = vadd.xlane.f32.xlu0 %v234
    %v236 = vpop.xlane.xlu0 %235
    %v237 = vsel %vm221, %v218, 0.0
    %238 = vadd.xlane.f32.xlu0 %v237
    %v239 = vpop.xlane.xlu0 %238
    %v240 = vsel %vm221, %v219, 0.0
    %241 = vadd.xlane.f32.xlu0 %v240
    %v242 = vpop.xlane.xlu0 %241
    %v243 = vsel %vm221, %v220, 0.0
    %244 = vadd.xlane.f32.xlu0 %v243
    %v245 = vpop.xlane.xlu0 %244
    %v254 = vlaneseq
    %v255 = vand.u32 %v254, 127
    %v256 = vlaneseq
    %v257 = vshrl.u32 %v256, 7
    %v258 = vsub.s32 %v255, %v257
    %v259 = vrot.slane %v224, %v258
    %v260 = vlaneseq
    %v261 = vshrl.u32 %v260, 7
    %v262 = vsub.s32 %v255, %v261
    %v263 = vrot.slane %v227, %v262
    %v264 = vlaneseq
    %v265 = vshrl.u32 %v264, 7
    %v266 = vsub.s32 %v255, %v265
    %v267 = vrot.slane %v230, %v266
    %v268 = vlaneseq
    %v269 = vshrl.u32 %v268, 7
    %v270 = vsub.s32 %v255, %v269
    %v271 = vrot.slane %v233, %v270
    %v272 = vlaneseq
    %v273 = vshrl.u32 %v272, 7
    %v274 = vsub.s32 %v255, %v273
    %v275 = vrot.slane %v236, %v274
    %v276 = vlaneseq
    %v277 = vshrl.u32 %v276, 7
    %v278 = vsub.s32 %v255, %v277
    %v279 = vrot.slane %v239, %v278
    %v280 = vlaneseq
    %v281 = vshrl.u32 %v280, 7
    %v282 = vsub.s32 %v255, %v281
    %v283 = vrot.slane %v242, %v282
    %v284 = vlaneseq
    %v285 = vshrl.u32 %v284, 7
    %v286 = vsub.s32 %v255, %v285
    %v287 = vrot.slane %v245, %v286
    %vm288 = vcmask 1041409
    %v289 = vsel %vm288, %v263, %v259
    %vm290 = vcmask 1042434
    %v291 = vsel %vm290, %v267, %v289
    %vm292 = vcmask 1043459
    %v293 = vsel %vm292, %v271, %v291
    %vm294 = vcmask 1044484
    %v295 = vsel %vm294, %v275, %v293
    %vm296 = vcmask 1045509
    %v297 = vsel %vm296, %v279, %v295
    %vm298 = vcmask 1046534
    %v299 = vsel %vm298, %v283, %v297
    %vm300 = vcmask 1047559
    %v301 = vsel %vm300, %v287, %v299
    %vm303 = vcmask 64512
    %v304 = vsel %vm303, %v301, -inf
    %305 = vmax.xlane.f32.xlu0 %v304
    %v306 = vpop.xlane.xlu0 %305
    %v308 = vlaneseq
    %v309 = vshrl.u32 %v308, 7
    %v310 = vsub.s32 0, %v309
    %v311 = vrot.slane %v306, %v310
    %v312 = vlaneseq
    %v313 = vshrl.u32 %v312, 7
    %v314 = vsub.s32 1, %v313
    %v315 = vrot.slane %v306, %v314
    %v316 = vlaneseq
    %v317 = vshrl.u32 %v316, 7
    %v318 = vsub.s32 2, %v317
    %v319 = vrot.slane %v306, %v318
    %v320 = vlaneseq
    %v321 = vshrl.u32 %v320, 7
    %v322 = vsub.s32 3, %v321
    %v323 = vrot.slane %v306, %v322
    %v324 = vlaneseq
    %v325 = vshrl.u32 %v324, 7
    %v326 = vsub.s32 4, %v325
    %v327 = vrot.slane %v306, %v326
    %v328 = vlaneseq
    %v329 = vshrl.u32 %v328, 7
    %v330 = vsub.s32 5, %v329
    %v331 = vrot.slane %v306, %v330
    %v332 = vlaneseq
    %v333 = vshrl.u32 %v332, 7
    %v334 = vsub.s32 6, %v333
    %v335 = vrot.slane %v306, %v334
    %v336 = vlaneseq
    %v337 = vshrl.u32 %v336, 7
    %v338 = vsub.s32 7, %v337
    %v339 = vrot.slane %v306, %v338
    %v348 = vsub.f32 %v224, %v311
    %v349 = vsub.f32 %v227, %v315
    %v350 = vsub.f32 %v230, %v319
    %v351 = vsub.f32 %v233, %v323
    %v352 = vsub.f32 %v236, %v327
    %v353 = vsub.f32 %v239, %v331
    %v354 = vsub.f32 %v242, %v335
    %v355 = vsub.f32 %v245, %v339
    %v356 = vmul.f32 %v348, 1.442695
    %v357 = vpow.pop %v356
    %v358 = vmul.f32 %v349, 1.442695
    %v359 = vpow.pop %v358
    %v360 = vmul.f32 %v350, 1.442695
    %v361 = vpow.pop %v360
    %v362 = vmul.f32 %v351, 1.442695
    %v363 = vpow.pop %v362
    %v364 = vmul.f32 %v352, 1.442695
    %v365 = vpow.pop %v364
    %v366 = vmul.f32 %v353, 1.442695
    %v367 = vpow.pop %v366
    %v368 = vmul.f32 %v354, 1.442695
    %v369 = vpow.pop %v368
    %v370 = vmul.f32 %v355, 1.442695
    %v371 = vpow.pop %v370
    %380 = vset.pattern.permute.xlu0 0
    %381 = vperm.xlu0 %380, %v357
    %v382 = vpop.permute.xlu0 %381
    %383 = vset.pattern.permute.xlu0 0
    %384 = vperm.xlu0 %383, %v359
    %v385 = vpop.permute.xlu0 %384
    %386 = vset.pattern.permute.xlu0 0
    %387 = vperm.xlu0 %386, %v361
    %v388 = vpop.permute.xlu0 %387
    %389 = vset.pattern.permute.xlu0 0
    %390 = vperm.xlu0 %389, %v363
    %v391 = vpop.permute.xlu0 %390
    %392 = vset.pattern.permute.xlu0 0
    %393 = vperm.xlu0 %392, %v365
    %v394 = vpop.permute.xlu0 %393
    %395 = vset.pattern.permute.xlu0 0
    %396 = vperm.xlu0 %395, %v367
    %v397 = vpop.permute.xlu0 %396
    %398 = vset.pattern.permute.xlu0 0
    %399 = vperm.xlu0 %398, %v369
    %v400 = vpop.permute.xlu0 %399
    %401 = vset.pattern.permute.xlu0 0
    %402 = vperm.xlu0 %401, %v371
    %v403 = vpop.permute.xlu0 %402
    %v404 = vlaneseq
    %v405 = vshrl.u32 %v404, 7
    %v406 = vsub.s32 %v255, %v405
    %v407 = vrot.slane %v382, %v406
    %v408 = vlaneseq
    %v409 = vshrl.u32 %v408, 7
    %v410 = vsub.s32 %v255, %v409
    %v411 = vrot.slane %v385, %v410
    %v412 = vlaneseq
    %v413 = vshrl.u32 %v412, 7
    %v414 = vsub.s32 %v255, %v413
    %v415 = vrot.slane %v388, %v414
    %v416 = vlaneseq
    %v417 = vshrl.u32 %v416, 7
    %v418 = vsub.s32 %v255, %v417
    %v419 = vrot.slane %v391, %v418
    %v420 = vlaneseq
    %v421 = vshrl.u32 %v420, 7
    %v422 = vsub.s32 %v255, %v421
    %v423 = vrot.slane %v394, %v422
    %v424 = vlaneseq
    %v425 = vshrl.u32 %v424, 7
    %v426 = vsub.s32 %v255, %v425
    %v427 = vrot.slane %v397, %v426
    %v428 = vlaneseq
    %v429 = vshrl.u32 %v428, 7
    %v430 = vsub.s32 %v255, %v429
    %v431 = vrot.slane %v400, %v430
    %v432 = vlaneseq
    %v433 = vshrl.u32 %v432, 7
    %v434 = vsub.s32 %v255, %v433
    %v435 = vrot.slane %v403, %v434
    %v436 = vsel %vm288, %v411, %v407
    %v437 = vsel %vm290, %v415, %v436
    %v438 = vsel %vm292, %v419, %v437
    %v439 = vsel %vm294, %v423, %v438
    %v440 = vsel %vm296, %v427, %v439
    %v441 = vsel %vm298, %v431, %v440
    %v442 = vsel %vm300, %v435, %v441
    %v444 = vsel %vm303, %v442, 0.0
    %445 = vadd.xlane.f32.xlu0 %v444
    %v446 = vpop.xlane.xlu0 %445
    %v448 = vlaneseq
    %v449 = vshrl.u32 %v448, 7
    %v450 = vsub.s32 0, %v449
    %v451 = vrot.slane %v446, %v450
    %v452 = vlaneseq
    %v453 = vshrl.u32 %v452, 7
    %v454 = vsub.s32 1, %v453
    %v455 = vrot.slane %v446, %v454
    %v456 = vlaneseq
    %v457 = vshrl.u32 %v456, 7
    %v458 = vsub.s32 2, %v457
    %v459 = vrot.slane %v446, %v458
    %v460 = vlaneseq
    %v461 = vshrl.u32 %v460, 7
    %v462 = vsub.s32 3, %v461
    %v463 = vrot.slane %v446, %v462
    %v464 = vlaneseq
    %v465 = vshrl.u32 %v464, 7
    %v466 = vsub.s32 4, %v465
    %v467 = vrot.slane %v446, %v466
    %v468 = vlaneseq
    %v469 = vshrl.u32 %v468, 7
    %v470 = vsub.s32 5, %v469
    %v471 = vrot.slane %v446, %v470
    %v472 = vlaneseq
    %v473 = vshrl.u32 %v472, 7
    %v474 = vsub.s32 6, %v473
    %v475 = vrot.slane %v446, %v474
    %v476 = vlaneseq
    %v477 = vshrl.u32 %v476, 7
    %v478 = vsub.s32 7, %v477
    %v479 = vrot.slane %v446, %v478
    %v488 = vrcp.pop %v451
    %v489 = vmul.f32 %v357, %v488
    %v490 = vrcp.pop %v455
    %v491 = vmul.f32 %v359, %v490
    %v492 = vrcp.pop %v459
    %v493 = vmul.f32 %v361, %v492
    %v494 = vrcp.pop %v463
    %v495 = vmul.f32 %v363, %v494
    %v496 = vrcp.pop %v467
    %v497 = vmul.f32 %v365, %v496
    %v498 = vrcp.pop %v471
    %v499 = vmul.f32 %v367, %v498
    %v500 = vrcp.pop %v475
    %v501 = vmul.f32 %v369, %v500
    %v502 = vrcp.pop %v479
    %v503 = vmul.f32 %v371, %v502
    %505 = vset.pattern.permute.xlu0 0
    %506 = vperm.xlu0 %505, %v489
    %v507 = vpop.permute.xlu0 %506
    %510 = vset.pattern.permute.xlu0 0
    %511 = vperm.xlu0 %510, %v491
    %v512 = vpop.permute.xlu0 %511
    %515 = vset.pattern.permute.xlu0 0
    %516 = vperm.xlu0 %515, %v493
    %v517 = vpop.permute.xlu0 %516
    %520 = vset.pattern.permute.xlu0 0
    %521 = vperm.xlu0 %520, %v495
    %v522 = vpop.permute.xlu0 %521
    %525 = vset.pattern.permute.xlu0 0
    %526 = vperm.xlu0 %525, %v497
    %v527 = vpop.permute.xlu0 %526
    %530 = vset.pattern.permute.xlu0 0
    %531 = vperm.xlu0 %530, %v499
    %v532 = vpop.permute.xlu0 %531
    %535 = vset.pattern.permute.xlu0 0
    %536 = vperm.xlu0 %535, %v501
    %v537 = vpop.permute.xlu0 %536
    %540 = vset.pattern.permute.xlu0 0
    %541 = vperm.xlu0 %540, %v503
    %v542 = vpop.permute.xlu0 %541
    %v544 = vmul.f32 %v507, %v198
    %v545 = vmul.f32 %v512, %v199
    %v546 = vmul.f32 %v517, %v200
    %v547 = vmul.f32 %v522, %v201
    %v548 = vmul.f32 %v527, %v202
    %v549 = vmul.f32 %v532, %v203
    %v550 = vmul.f32 %v537, %v204
    %v551 = vmul.f32 %v542, %v205
    %v552 = vsel %vm221, %v544, 0.0
    %v553 = vrot.slane %v552, 4
    %v554 = vadd.f32 %v552, %v553
    %v555 = vrot.slane %v554, 2
    %v556 = vadd.f32 %v554, %v555
    %v557 = vrot.slane %v556, 1
    %v558 = vadd.f32 %v556, %v557
    %v559 = vsel %vm221, %v545, 0.0
    %v560 = vrot.slane %v559, 4
    %v561 = vadd.f32 %v559, %v560
    %v562 = vrot.slane %v561, 2
    %v563 = vadd.f32 %v561, %v562
    %v564 = vrot.slane %v563, 1
    %v565 = vadd.f32 %v563, %v564
    %v566 = vsel %vm221, %v546, 0.0
    %v567 = vrot.slane %v566, 4
    %v568 = vadd.f32 %v566, %v567
    %v569 = vrot.slane %v568, 2
    %v570 = vadd.f32 %v568, %v569
    %v571 = vrot.slane %v570, 1
    %v572 = vadd.f32 %v570, %v571
    %v573 = vsel %vm221, %v547, 0.0
    %v574 = vrot.slane %v573, 4
    %v575 = vadd.f32 %v573, %v574
    %v576 = vrot.slane %v575, 2
    %v577 = vadd.f32 %v575, %v576
    %v578 = vrot.slane %v577, 1
    %v579 = vadd.f32 %v577, %v578
    %v580 = vsel %vm221, %v548, 0.0
    %v581 = vrot.slane %v580, 4
    %v582 = vadd.f32 %v580, %v581
    %v583 = vrot.slane %v582, 2
    %v584 = vadd.f32 %v582, %v583
    %v585 = vrot.slane %v584, 1
    %v586 = vadd.f32 %v584, %v585
    %v587 = vsel %vm221, %v549, 0.0
    %v588 = vrot.slane %v587, 4
    %v589 = vadd.f32 %v587, %v588
    %v590 = vrot.slane %v589, 2
    %v591 = vadd.f32 %v589, %v590
    %v592 = vrot.slane %v591, 1
    %v593 = vadd.f32 %v591, %v592
    %v594 = vsel %vm221, %v550, 0.0
    %v595 = vrot.slane %v594, 4
    %v596 = vadd.f32 %v594, %v595
    %v597 = vrot.slane %v596, 2
    %v598 = vadd.f32 %v596, %v597
    %v599 = vrot.slane %v598, 1
    %v600 = vadd.f32 %v598, %v599
    %v601 = vsel %vm221, %v551, 0.0
    %v602 = vrot.slane %v601, 4
    %v603 = vadd.f32 %v601, %v602
    %v604 = vrot.slane %v603, 2
    %v605 = vadd.f32 %v603, %v604
    %v606 = vrot.slane %v605, 1
    %v607 = vadd.f32 %v605, %v606
    %v616 = vsel %vm288, %v565, %v558
    %v617 = vsel %vm290, %v572, %v616
    %v618 = vsel %vm292, %v579, %v617
    %v619 = vsel %vm294, %v586, %v618
    %v620 = vsel %vm296, %v593, %v619
    %v621 = vsel %vm298, %v600, %v620
    %v622 = vsel %vm300, %v607, %v621
    %624 = vst.msk [vmem:[#allocation2] sm:$0xff] %vm221, %v622
    // Predicated region
    $region18: #{tpu_custom_call.1} parent=1 // pred_check
      _
    $region19: #{tpu_custom_call.1} parent=1 // pred_check_branch
      %626 = sbr.rel (0) target = $region21
    $region20: #{tpu_custom_call.1} parent=1 // pred_region
      %s628 = ssub.s32 128, 128
      %629 = vsyncadd [#allocation3], %s628
      %s631 = sshll.u32 [#allocation2], 4
      %s632 = int_to_ptr.vmem [resolvable:$true] %s631
      %634 = dma.vmem_to_hbm [thread:$0]  %s632, 128, %s4, [#allocation3]
    $region21: #{tpu_custom_call.1} parent=1 // pred_fallthru
      _
    // Predicated region
    $region22: #{tpu_custom_call.1} parent=1 // pred_check
      _
    $region23: #{tpu_custom_call.1} parent=1 // pred_check_branch
      %636 = sbr.rel (0) target = $region25
    $region24: #{tpu_custom_call.1} parent=1 // pred_region
      %637 = dma.done [#allocation3], 128
    $region25: #{tpu_custom_call.1} parent=1 // pred_fallthru
      _
    %638 = vsyncpa [#allocation3], 1

</llo_original>
